<compile_context>
chip_gen: v7x
topology: tpu7x:2x2x1
jax: 0.10.0
libtpu: 0.0.40
codegen_flags: <defaults>
</compile_context>

<pallas_src>
import functools

import jax
import jax.numpy as jnp
from jax.experimental import pallas as pl
from jax.experimental.pallas import tpu as pltpu

_EPS = 1e-5  # PyTorch BatchNorm1d default


def _stats_kernel(x_ref, mw_ref, sum_ref, sq_ref, *, n_total):
    """Pass 1: accumulate per-channel sum(x), sum(x^2); finalize mean and 1/(var+eps)."""
    i = pl.program_id(0)

    @pl.when(i == 0)
    def _init():
        sum_ref[...] = jnp.zeros_like(sum_ref)
        sq_ref[...] = jnp.zeros_like(sq_ref)

    x = x_ref[...].astype(jnp.float32)  # per-tile cast only (keeps HBM traffic in native dtype)
    sum_ref[...] += jnp.sum(x, axis=0, keepdims=True)
    sq_ref[...] += jnp.sum(x * x, axis=0, keepdims=True)

    @pl.when(i == pl.num_programs(0) - 1)
    def _finalize():
        inv_n = jnp.float32(1.0 / n_total)          # global N = B*T, NOT tile rows
        mean = sum_ref[...] * inv_n                  # (1, H)
        var = sq_ref[...] * inv_n - mean * mean      # biased variance, (1, H)
        w = pl.reciprocal(var + _EPS, approx=False)  # once per channel (EUP), no per-elem rsqrt
        mw_ref[0:1, :] = mean
        mw_ref[1:2, :] = w


def _norm_kernel(mw_ref, x_ref, o_ref):
    """Pass 2: per-row sum_h w*(x-mean)^2, written as a lane-dense (1, TN) tile."""
    x = x_ref[...].astype(jnp.float32)
    mean = mw_ref[0:1, :]                # (1, H)
    w = mw_ref[1:2, :]                   # (1, H)
    c = x - mean                         # (TN, H); no xn temporary, no rsqrt
    vals = jnp.sum((c * w) * c, axis=-1)  # (TN,) VPU + XLU lane reduce (no MXU)
    o_ref[...] = vals.reshape(1, -1).astype(o_ref.dtype)


def _pick_row_tile(n, h):
    """Largest lane-dense row-tile (multiple of 128) dividing N that double-buffers cheaply."""
    budget = 8 * 1024 * 1024  # f32 double-buffered input tile budget (safe on v5e/v6e/v7x)
    for cand in (512, 256, 128):
        if n % cand == 0 and 2 * cand * h * 4 <= budget:
            return cand
    if n % 128 == 0:
        return 128
    # TODO(synk): ragged N (not a multiple of 128) falls back to a single block;
    # pad + mask the stats pass if production shapes ever hit this.
    return n


def prob_head(x):
    """x: (B, T, H). Returns (B, T) = ||BatchNorm1d(flatten(x))||^2 per row (train-mode BN)."""
    B, T, H = x.shape
    N = B * T
    x_flat = x.reshape(N, H)

    tn = _pick_row_tile(N, H)
    num_tiles = N // tn

    # Scoped VMEM: sized to the tiles with headroom, capped well under v7x's 64 MiB physical.
    vmem_limit = int(min(48 * 1024 * 1024, max(16 * 1024 * 1024, 8 * tn * H * 4)))

    # Pass 1: per-channel mean and 1/(var+eps), accumulated over row tiles.
    mw = pl.pallas_call(
        functools.partial(_stats_kernel, n_total=N),
        out_shape=jax.ShapeDtypeStruct((2, H), jnp.float32),
        grid=(num_tiles,),
        in_specs=[pl.BlockSpec((tn, H), lambda i: (i, 0))],
        out_specs=pl.BlockSpec((2, H), lambda i: (0, 0)),
        scratch_shapes=[pltpu.VMEM((1, H), jnp.float32),
                        pltpu.VMEM((1, H), jnp.float32)],
        compiler_params=pltpu.CompilerParams(
            dimension_semantics=("arbitrary",),
            vmem_limit_bytes=vmem_limit),
    )(x_flat)

    # Pass 2: stream row tiles again, write a lane-dense (1, N) row-norm slab.
    out = pl.pallas_call(
        _norm_kernel,
        out_shape=jax.ShapeDtypeStruct((1, N), jnp.float32),
        grid=(num_tiles,),
        in_specs=[pl.BlockSpec((2, H), lambda i: (0, 0)),
                  pl.BlockSpec((tn, H), lambda i: (i, 0))],
        out_specs=pl.BlockSpec((1, tn), lambda i: (0, i)),
        compiler_params=pltpu.CompilerParams(
            dimension_semantics=("parallel",),
            vmem_limit_bytes=vmem_limit),
    )(mw, x_flat)

    return out.reshape(B, T)


def _prob_head_ref(x):
    """Pure-JAX reference mirroring the PyTorch module (training-mode BN)."""
    B, T, H = x.shape
    xf = x.reshape(B * T, H).astype(jnp.float32)
    mean = jnp.mean(xf, axis=0, keepdims=True)
    var = jnp.mean((xf - mean) ** 2, axis=0, keepdims=True)  # biased
    xn = (xf - mean) / jnp.sqrt(var + _EPS)
    return jnp.sum(xn * xn, axis=-1).reshape(B, T)


if __name__ == "__main__":
    key = jax.random.PRNGKey(0)

    # Small shape implied by the module: batch=2, seq=8, hidden=32.
    B, T, H = 2, 8, 32
    x = jax.random.normal(key, (B, T, H), dtype=jnp.float32)
    y = jax.block_until_ready(prob_head(x))
    y_ref = _prob_head_ref(x)
    assert y.shape == (B, T)
    assert jnp.allclose(y, y_ref, rtol=1e-4, atol=1e-3), "mismatch vs reference (small shape)"

    # Larger shape to exercise the tiled accumulation + lane-dense store path.
    B2, T2, H2 = 4, 256, 128
    x2 = jax.random.normal(jax.random.PRNGKey(1), (B2, T2, H2), dtype=jnp.float32)
    y2 = jax.block_until_ready(prob_head(x2))
    y2_ref = _prob_head_ref(x2)
    assert jnp.allclose(y2, y2_ref, rtol=1e-4, atol=1e-3), "mismatch vs reference (tiled shape)"

    print("KERNEL_OK")
</pallas_src>

<mosaic_0001>
module attributes {stable_mosaic.version = 11 : i64} {
  func.func @_stats_kernel(%arg0: i32, %arg1: memref<16x32xf32, #tpu.memory_space<vmem>>, %arg2: memref<2x32xf32, #tpu.memory_space<vmem>>, %arg3: memref<1x32xf32, #tpu.memory_space<vmem>>, %arg4: memref<1x32xf32, #tpu.memory_space<vmem>>) attributes {dimension_semantics = [#tpu.dimension_semantics<arbitrary>], iteration_bounds = array<i64: 1>, scalar_prefetch = 0 : i64, scratch_operands = 2 : i64, tpu.core_type = #tpu.core_type<tc>, window_params = [{transform_indices = @transform_0, window_bounds = array<i64: 16, 32>}, {pipeline_mode = #tpu.pipeline_mode<synchronous>, transform_indices = @transform_1, window_bounds = array<i64: 2, 32>}]} {
    %c0_i32 = arith.constant 0 : i32
    %0 = arith.cmpi eq, %arg0, %c0_i32 : i32
    %1 = arith.extui %0 : i1 to i32
    %c0_i32_0 = arith.constant 0 : i32
    %2 = arith.cmpi ne, %1, %c0_i32_0 : i32
    scf.if %2 {
      %cst_13 = arith.constant 0.000000e+00 : f32
      %18 = vector.broadcast %cst_13 : f32 to vector<1x32xf32>
      %c0_14 = arith.constant 0 : index
      %c0_15 = arith.constant 0 : index
      %19 = vector.load %arg3[%c0_14, %c0_15] : memref<1x32xf32, #tpu.memory_space<vmem>>, vector<1x32xf32>
      tpu.vector_store %arg3[%c0_14, %c0_15], %18 {strides = array<i32>} : memref<1x32xf32, #tpu.memory_space<vmem>>, vector<1x32xf32>,
      %cst_16 = arith.constant 0.000000e+00 : f32
      %20 = vector.broadcast %cst_16 : f32 to vector<1x32xf32>
      %c0_17 = arith.constant 0 : index
      %c0_18 = arith.constant 0 : index
      %21 = vector.load %arg4[%c0_17, %c0_18] : memref<1x32xf32, #tpu.memory_space<vmem>>, vector<1x32xf32>
      tpu.vector_store %arg4[%c0_17, %c0_18], %20 {strides = array<i32>} : memref<1x32xf32, #tpu.memory_space<vmem>>, vector<1x32xf32>,
    } else {
    }
    %c0 = arith.constant 0 : index
    %c0_1 = arith.constant 0 : index
    %3 = vector.load %arg1[%c0, %c0_1] : memref<16x32xf32, #tpu.memory_space<vmem>>, vector<16x32xf32>
    %c0_2 = arith.constant 0 : index
    %c0_3 = arith.constant 0 : index
    %4 = vector.load %arg3[%c0_2, %c0_3] : memref<1x32xf32, #tpu.memory_space<vmem>>, vector<1x32xf32>
    %cst = arith.constant dense<0.000000e+00> : vector<32xf32>
    %5 = vector.multi_reduction <add>, %3, %cst [0] : vector<16x32xf32> to vector<32xf32>
    %6 = vector.shape_cast %5 : vector<32xf32> to vector<1x32xf32>
    %7 = arith.addf %4, %6 : vector<1x32xf32>
    %c0_4 = arith.constant 0 : index
    %c0_5 = arith.constant 0 : index
    %8 = vector.load %arg3[%c0_4, %c0_5] : memref<1x32xf32, #tpu.memory_space<vmem>>, vector<1x32xf32>
    tpu.vector_store %arg3[%c0_4, %c0_5], %7 {strides = array<i32>} : memref<1x32xf32, #tpu.memory_space<vmem>>, vector<1x32xf32>,
    %c0_6 = arith.constant 0 : index
    %c0_7 = arith.constant 0 : index
    %9 = vector.load %arg4[%c0_6, %c0_7] : memref<1x32xf32, #tpu.memory_space<vmem>>, vector<1x32xf32>
    %10 = arith.mulf %3, %3 : vector<16x32xf32>
    %cst_8 = arith.constant dense<0.000000e+00> : vector<32xf32>
    %11 = vector.multi_reduction <add>, %10, %cst_8 [0] : vector<16x32xf32> to vector<32xf32>
    %12 = vector.shape_cast %11 : vector<32xf32> to vector<1x32xf32>
    %13 = arith.addf %9, %12 : vector<1x32xf32>
    %c0_9 = arith.constant 0 : index
    %c0_10 = arith.constant 0 : index
    %14 = vector.load %arg4[%c0_9, %c0_10] : memref<1x32xf32, #tpu.memory_space<vmem>>, vector<1x32xf32>
    tpu.vector_store %arg4[%c0_9, %c0_10], %13 {strides = array<i32>} : memref<1x32xf32, #tpu.memory_space<vmem>>, vector<1x32xf32>,
    %c0_i32_11 = arith.constant 0 : i32
    %15 = arith.cmpi eq, %arg0, %c0_i32_11 : i32
    %16 = arith.extui %15 : i1 to i32
    %c0_i32_12 = arith.constant 0 : i32
    %17 = arith.cmpi ne, %16, %c0_i32_12 : i32
    scf.if %17 {
      %c0_13 = arith.constant 0 : index
      %c0_14 = arith.constant 0 : index
      %18 = vector.load %arg3[%c0_13, %c0_14] : memref<1x32xf32, #tpu.memory_space<vmem>>, vector<1x32xf32>
      %cst_15 = arith.constant 6.250000e-02 : f32
      %19 = vector.broadcast %cst_15 : f32 to vector<1x32xf32>
      %20 = arith.mulf %18, %19 : vector<1x32xf32>
      %c0_16 = arith.constant 0 : index
      %c0_17 = arith.constant 0 : index
      %21 = vector.load %arg4[%c0_16, %c0_17] : memref<1x32xf32, #tpu.memory_space<vmem>>, vector<1x32xf32>
      %cst_18 = arith.constant 6.250000e-02 : f32
      %22 = vector.broadcast %cst_18 : f32 to vector<1x32xf32>
      %23 = arith.mulf %21, %22 : vector<1x32xf32>
      %24 = arith.mulf %20, %20 : vector<1x32xf32>
      %25 = arith.subf %23, %24 : vector<1x32xf32>
      %cst_19 = arith.constant 9.99999974E-6 : f32
      %26 = vector.broadcast %cst_19 : f32 to vector<1x32xf32>
      %27 = arith.addf %25, %26 : vector<1x32xf32>
      %28 = tpu.reciprocal %27 : vector<1x32xf32> -> vector<1x32xf32>
      %c0_20 = arith.constant 0 : index
      %c0_21 = arith.constant 0 : index
      %29 = vector.load %arg2[%c0_20, %c0_21] : memref<2x32xf32, #tpu.memory_space<vmem>>, vector<1x32xf32>
      tpu.vector_store %arg2[%c0_20, %c0_21], %20 {strides = array<i32>} : memref<2x32xf32, #tpu.memory_space<vmem>>, vector<1x32xf32>,
      %c1 = arith.constant 1 : index
      %c0_22 = arith.constant 0 : index
      %30 = vector.load %arg2[%c1, %c0_22] : memref<2x32xf32, #tpu.memory_space<vmem>>, vector<1x32xf32>
      tpu.vector_store %arg2[%c1, %c0_22], %28 {strides = array<i32>} : memref<2x32xf32, #tpu.memory_space<vmem>>, vector<1x32xf32>,
    } else {
    }
    return
  }
  func.func @transform_0(%arg0: i32) -> (i32, i32) {
    %c0_i32 = arith.constant 0 : i32
    %c0_i32_0 = arith.constant 0 : i32
    return %arg0, %c0_i32 : i32, i32
  }
  func.func @transform_1(%arg0: i32) -> (i32, i32) {
    %c0_i32 = arith.constant 0 : i32
    %c0_i32_0 = arith.constant 0 : i32
    %c0_i32_1 = arith.constant 0 : i32
    return %c0_i32, %c0_i32_0 : i32, i32
  }
}

</mosaic_0001>

<llo_original>
// kernel: tpu_custom_call.1
$region0: #{tpu_custom_call.1}
  #allocation0 [shape = 'u32[]', space=smem, size = 0x4, offset = 0x4, fixed_abs, tag = 'smem constant byte address 0x4 - core index']
  #allocation1 [shape = 'u32[144,128]{1,0:T(1,128)}', space=vmem, size = 0x12000, scoped, tag = 'internal scratch']
  #allocation2 [shape = 'f32[1,32]{1,0:T(1,128)}', space=vmem, size = 0x200, scoped, tag = 'scratch operand']
  #allocation3 [shape = 'f32[1,32]{1,0:T(1,128)}', space=vmem, size = 0x200, scoped, tag = 'scratch operand']
  %s0 = inlined_call_operand.hbm [shape: f32[16,32], index: 0, kind: input, shape index: {}]
  %s1 = inlined_call_operand.hbm [shape: f32[2,32], index: 1, kind: output, shape index: {}]
  %s2 = sld [smem:[#allocation0]]
  $region26: #{tpu_custom_call.1} parent=0
    _
  %s4 = ssub.s32 1, %s2
  %s5 = scalar_select 0, %s4, %s2
  $region1: #{tpu_custom_call.1} parent=0
    #allocation4 [shape = 'u8[8192]{0}', space=vmem, size = 0x2000, scoped, tag = 'input window, operand 0, single buffered']
    #allocation5 [shape = 's32[1]{0}', space=sflag, size = 0x4, scoped, tag = 'scoped memory for tpu_custom_call.1']
    #allocation6 [shape = 's32[1]{0}', space=sflag, size = 0x4, scoped, tag = 'scoped memory for tpu_custom_call.1']
    #allocation7 [shape = 'u8[1024]{0}', space=vmem, size = 0x400, scoped, tag = 'output window, operand 0, single buffered']
    %6 = vsyncpa [#allocation5], 0
    %7 = vsyncpa [#allocation6], 0
    // Predicated region
    $region2: #{tpu_custom_call.1} parent=1 // pred_check
      _
    $region3: #{tpu_custom_call.1} parent=1 // pred_check_branch
      %9 = sbr.rel (0) target = $region5
    $region4: #{tpu_custom_call.1} parent=1 // pred_region
      %s11 = ssub.s32 256, 256
      %12 = vsyncadd [#allocation5], %s11
      %s13 = sshll.u32 [#allocation4], 4
      %s14 = int_to_ptr.vmem [resolvable:$true] %s13
      %19 = dma.hbm_to_vmem [thread:$0]  %s0, 256, %s14, [#allocation5], 128, 128, 8
    $region5: #{tpu_custom_call.1} parent=1 // pred_fallthru
      _
    // Predicated region
    $region6: #{tpu_custom_call.1} parent=1 // pred_check
      _
    $region7: #{tpu_custom_call.1} parent=1 // pred_check_branch
      %21 = sbr.rel (0) target = $region9
    $region8: #{tpu_custom_call.1} parent=1 // pred_region
      %22 = dma.done [#allocation5], 256
    $region9: #{tpu_custom_call.1} parent=1 // pred_fallthru
      _
    %p23 = scmp.eq.s32.totalorder 0, 0
    // Predicated region
    $region10: #{tpu_custom_call.1} parent=1 // pred_check
      %p24 = pneg %p23
    $region11: #{tpu_custom_call.1} parent=1 // pred_check_branch
      %26 = sbr.rel (%p24) target = $region13
    $region12: #{tpu_custom_call.1} parent=1 // pred_region
      %vm27 = vcmask 253952
      %28 = vst.msk [vmem:[#allocation2] sm:$0x1] %vm27, 0.0
      %29 = vst.msk [vmem:[#allocation3] sm:$0x1] %vm27, 0.0
    $region13: #{tpu_custom_call.1} parent=1 // pred_fallthru
      _
    %v30 = vld [vmem:[#allocation4] sm:$0xff]
    %v31 = vld [vmem:[#allocation4 + $0x8] sm:$0xff]
    %v32 = vld [vmem:[#allocation2] sm:$0x1]
    %vm33 = vcmask 261120
    %v34 = vsel %vm33, %v30, 0.0
    %v35 = vsel %vm33, %v31, 0.0
    %v36 = vadd.f32 %v34, %v35
    %v37 = vrot.slane %v36, 4
    %v38 = vadd.f32 %v36, %v37
    %v39 = vrot.slane %v38, 2
    %v40 = vadd.f32 %v38, %v39
    %v41 = vrot.slane %v40, 1
    %v42 = vadd.f32 %v40, %v41
    %v43 = vadd.f32 %v32, %v42
    %vm44 = vcmask 253952
    %45 = vst.msk [vmem:[#allocation2] sm:$0x1] %vm44, %v43
    %v46 = vld [vmem:[#allocation3] sm:$0x1]
    %v47 = vmul.f32 %v30, %v30
    %v48 = vmul.f32 %v31, %v31
    %v49 = vsel %vm33, %v47, 0.0
    %v50 = vsel %vm33, %v48, 0.0
    %v51 = vadd.f32 %v49, %v50
    %v52 = vrot.slane %v51, 4
    %v53 = vadd.f32 %v51, %v52
    %v54 = vrot.slane %v53, 2
    %v55 = vadd.f32 %v53, %v54
    %v56 = vrot.slane %v55, 1
    %v57 = vadd.f32 %v55, %v56
    %v58 = vadd.f32 %v46, %v57
    %59 = vst.msk [vmem:[#allocation3] sm:$0x1] %vm44, %v58
    // Predicated region
    $region14: #{tpu_custom_call.1} parent=1 // pred_check
      %p60 = pneg %p23
    $region15: #{tpu_custom_call.1} parent=1 // pred_check_branch
      %62 = sbr.rel (%p60) target = $region17
    $region16: #{tpu_custom_call.1} parent=1 // pred_region
      %v63 = vld [vmem:[#allocation2] sm:$0x1]
      %v64 = vmul.f32 %v63, 0.0625
      %v65 = vld [vmem:[#allocation3] sm:$0x1]
      %v66 = vmul.f32 %v65, 0.0625
      %v67 = vmul.f32 %v64, %v64
      %v68 = vsub.f32 %v66, %v67
      %v69 = vadd.f32 %v68, 1e-05
      %v70 = vrcp.pop %v69
      %71 = vst.msk [vmem:[#allocation7] sm:$0x1] %vm44, %v64
      %72 = vst.msk [vmem:[#allocation7 + $0x1] sm:$0x1] %vm44, %v70
    $region17: #{tpu_custom_call.1} parent=1 // pred_fallthru
      _
    // Predicated region
    $region18: #{tpu_custom_call.1} parent=1 // pred_check
      _
    $region19: #{tpu_custom_call.1} parent=1 // pred_check_branch
      %74 = sbr.rel (0) target = $region21
    $region20: #{tpu_custom_call.1} parent=1 // pred_region
      %s76 = ssub.s32 32, 32
      %77 = vsyncadd [#allocation6], %s76
      %s79 = sshll.u32 [#allocation7], 4
      %s80 = int_to_ptr.vmem [resolvable:$true] %s79
      %82 = dma.vmem_to_hbm [thread:$0]  %s80, 32, %s1, [#allocation6]
    $region21: #{tpu_custom_call.1} parent=1 // pred_fallthru
      _
    // Predicated region
    $region22: #{tpu_custom_call.1} parent=1 // pred_check
      _
    $region23: #{tpu_custom_call.1} parent=1 // pred_check_branch
      %84 = sbr.rel (0) target = $region25
    $region24: #{tpu_custom_call.1} parent=1 // pred_region
      %85 = dma.done [#allocation6], 32
    $region25: #{tpu_custom_call.1} parent=1 // pred_fallthru
      _
    %86 = vsyncpa [#allocation5], 1
    %87 = vsyncpa [#allocation6], 1

</llo_original>
